<compile_context>
chip_gen: v7x
topology: tpu7x:2x2x1
jax: 0.10.0
libtpu: 0.0.40
codegen_flags: <defaults>
</compile_context>

<pallas_src>
import functools

import jax
import jax.numpy as jnp
from jax.experimental import pallas as pl
from jax.experimental.pallas import tpu as pltpu

LANE = 128          # lane width / padded hidden & output width
SUBLANE = 8         # fp32 sublane
MAX_TB = 1024       # batch-tile cap (keeps double-buffering inside v7x VMEM)


def _round_up(n, m):
    return ((n + m - 1) // m) * m


def _mlp_kernel(x_ref, w1_ref, b1_ref, w2_ref, b2_ref, w3_ref, b3_ref, o_ref):
    # Load biases once into fp32 vregs (JAX does not CSE broadcasts).
    b1 = b1_ref[...]
    b2 = b2_ref[...]
    b3 = b3_ref[...]

    # lin1 + ReLU: bf16 x bf16 -> fp32 accumulate on MXU; bias/ReLU in fp32 (VPU).
    h1 = jnp.dot(x_ref[...], w1_ref[...], preferred_element_type=jnp.float32)
    h1 = jnp.maximum(h1 + b1, 0.0).astype(jnp.bfloat16)

    # lin2 + ReLU
    h2 = jnp.dot(h1, w2_ref[...], preferred_element_type=jnp.float32)
    h2 = jnp.maximum(h2 + b2, 0.0).astype(jnp.bfloat16)

    # lin3 (no activation); lane-dense (TB, 128) fp32 store.
    out = jnp.dot(h2, w3_ref[...], preferred_element_type=jnp.float32)
    o_ref[...] = (out + b3).astype(o_ref.dtype)


def init_params(key, in_features=784, hidden=100, out_features=10):
    """PyTorch-Linear-style uniform init; weights stored as (in, out) fp32."""
    ks = jax.random.split(key, 6)

    def linear_init(kw, kb, fan_in, fan_out):
        bound = 1.0 / jnp.sqrt(fan_in)
        # (in, out) == PyTorch weight (out, in) transposed, so y = x @ W + b.
        w = jax.random.uniform(kw, (fan_in, fan_out), jnp.float32, -bound, bound)
        b = jax.random.uniform(kb, (1, fan_out), jnp.float32, -bound, bound)
        return w, b

    w1, b1 = linear_init(ks[0], ks[1], in_features, hidden)
    w2, b2 = linear_init(ks[2], ks[3], hidden, hidden)
    w3, b3 = linear_init(ks[4], ks[5], hidden, out_features)
    return {"w1": w1, "b1": b1, "w2": w2, "b2": b2, "w3": w3, "b3": b3}


def prepare_params(params, hidden_pad=LANE, out_pad=LANE):
    """One-time prep: zero-pad hidden/out dims to 128 lanes, cast weights to bf16.

    Zero padding of w2 rows / w3 rows guarantees the padded (always-zero after
    ReLU) hidden lanes contribute nothing; padded output columns are sliced off
    in the wrapper.
    """
    w1, b1, w2, b2, w3, b3 = (params[k] for k in ("w1", "b1", "w2", "b2", "w3", "b3"))
    out_features = w3.shape[1]

    def pad2(a, rows, cols):
        return jnp.pad(a, ((0, rows - a.shape[0]), (0, cols - a.shape[1])))

    prepped = {
        "w1": pad2(w1, w1.shape[0], hidden_pad).astype(jnp.bfloat16),
        "b1": pad2(b1, 1, hidden_pad).astype(jnp.float32),
        "w2": pad2(w2, hidden_pad, hidden_pad).astype(jnp.bfloat16),
        "b2": pad2(b2, 1, hidden_pad).astype(jnp.float32),
        "w3": pad2(w3, hidden_pad, out_pad).astype(jnp.bfloat16),
        "b3": pad2(b3, 1, out_pad).astype(jnp.float32),
    }
    return prepped, out_features


def mlp_forward(x, prepped, out_features):
    """x: (B, in_features) fp32/bf16. prepped: padded bf16/fp32 params.

    Returns (B, out_features) fp32 logits.
    """
    w1, b1, w2, b2, w3, b3 = (prepped[k] for k in ("w1", "b1", "w2", "b2", "w3", "b3"))
    B, in_features = x.shape
    out_pad = w3.shape[1]

    # Batch tile: multiple of the fp32 sublane, capped so 2-deep pipelining of
    # bf16 x + fp32 out fits v7x's scoped-VMEM default with room to spare.
    TB = min(MAX_TB, _round_up(B, SUBLANE))
    B_pad = _round_up(B, TB)

    xb = x.astype(jnp.bfloat16)
    if B_pad != B:
        xb = jnp.pad(xb, ((0, B_pad - B), (0, 0)))

    grid = (B_pad // TB,)

    pinned = lambda a: pl.BlockSpec(a.shape, lambda i: (0,) * a.ndim)

    y = pl.pallas_call(
        _mlp_kernel,
        out_shape=jax.ShapeDtypeStruct((B_pad, out_pad), jnp.float32),
        grid=grid,
        in_specs=[
            pl.BlockSpec((TB, in_features), lambda i: (i, 0)),  # x: batch-tiled
            pinned(w1), pinned(b1),                              # weights: VMEM-resident
            pinned(w2), pinned(b2),
            pinned(w3), pinned(b3),
        ],
        out_specs=pl.BlockSpec((TB, out_pad), lambda i: (i, 0)),
        compiler_params=pltpu.CompilerParams(
            dimension_semantics=("parallel",),
        ),
    )(xb, w1, b1, w2, b2, w3, b3)

    return y[:B, :out_features]


if __name__ == "__main__":
    key = jax.random.PRNGKey(0)
    k_x, k_p = jax.random.split(key)

    B, in_features, hidden, out_features = 8, 784, 100, 10
    x = jax.random.normal(k_x, (B, in_features), jnp.float32)
    params = init_params(k_p, in_features=in_features, hidden=hidden,
                         out_features=out_features)
    prepped, out_f = prepare_params(params)

    fwd = jax.jit(functools.partial(mlp_forward, out_features=out_f))
    y = fwd(x, prepped)
    jax.block_until_ready(y)
    assert y.shape == (B, out_features)

    # Reference 1: same bf16-operand / fp32-accumulate path (tight check of the kernel).
    def ref_bf16(x, p):
        xb = x.astype(jnp.bfloat16)
        h1 = jnp.maximum(
            jnp.dot(xb, p["w1"], preferred_element_type=jnp.float32) + p["b1"], 0.0)
        h2 = jnp.maximum(
            jnp.dot(h1.astype(jnp.bfloat16), p["w2"],
                    preferred_element_type=jnp.float32) + p["b2"], 0.0)
        out = jnp.dot(h2.astype(jnp.bfloat16), p["w3"],
                      preferred_element_type=jnp.float32) + p["b3"]
        return out[:, :out_features]

    y_ref_bf16 = ref_bf16(x, prepped)
    assert jnp.allclose(y, y_ref_bf16, atol=2e-3, rtol=2e-3), "mismatch vs bf16 reference"

    # Reference 2: full-precision PyTorch-equivalent forward (loose check).
    def ref_fp32(x, p):
        h1 = jnp.maximum(x @ p["w1"] + p["b1"], 0.0)
        h2 = jnp.maximum(h1 @ p["w2"] + p["b2"], 0.0)
        return h2 @ p["w3"] + p["b3"]

    y_ref_fp32 = ref_fp32(x, params)
    assert jnp.allclose(y, y_ref_fp32, atol=5e-2, rtol=5e-2), "mismatch vs fp32 reference"

    print("KERNEL_OK")
</pallas_src>

<mosaic_0001>
module attributes {stable_mosaic.version = 11 : i64} {
  func.func @_mlp_kernel(%arg0: i32, %arg1: memref<8x784xbf16, #tpu.memory_space<vmem>>, %arg2: memref<784x128xbf16, #tpu.memory_space<vmem>>, %arg3: memref<1x128xf32, #tpu.memory_space<vmem>>, %arg4: memref<128x128xbf16, #tpu.memory_space<vmem>>, %arg5: memref<1x128xf32, #tpu.memory_space<vmem>>, %arg6: memref<128x128xbf16, #tpu.memory_space<vmem>>, %arg7: memref<1x128xf32, #tpu.memory_space<vmem>>, %arg8: memref<8x128xf32, #tpu.memory_space<vmem>>) attributes {dimension_semantics = [#tpu.dimension_semantics<parallel>], iteration_bounds = array<i64: 1>, scalar_prefetch = 0 : i64, scratch_operands = 0 : i64, tpu.core_type = #tpu.core_type<tc>, window_params = [{transform_indices = @transform_0, window_bounds = array<i64: 8, 784>}, {pipeline_mode = #tpu.pipeline_mode<synchronous>, transform_indices = @transform_1, window_bounds = array<i64: 784, 128>}, {pipeline_mode = #tpu.pipeline_mode<synchronous>, transform_indices = @transform_2, window_bounds = array<i64: 1, 128>}, {pipeline_mode = #tpu.pipeline_mode<synchronous>, transform_indices = @transform_3, window_bounds = array<i64: 128, 128>}, {pipeline_mode = #tpu.pipeline_mode<synchronous>, transform_indices = @transform_4, window_bounds = array<i64: 1, 128>}, {pipeline_mode = #tpu.pipeline_mode<synchronous>, transform_indices = @transform_5, window_bounds = array<i64: 128, 128>}, {pipeline_mode = #tpu.pipeline_mode<synchronous>, transform_indices = @transform_6, window_bounds = array<i64: 1, 128>}, {transform_indices = @transform_7, window_bounds = array<i64: 8, 128>}]} {
    %c0 = arith.constant 0 : index
    %c0_0 = arith.constant 0 : index
    %0 = vector.load %arg3[%c0, %c0_0] : memref<1x128xf32, #tpu.memory_space<vmem>>, vector<1x128xf32>
    %c0_1 = arith.constant 0 : index
    %c0_2 = arith.constant 0 : index
    %1 = vector.load %arg5[%c0_1, %c0_2] : memref<1x128xf32, #tpu.memory_space<vmem>>, vector<1x128xf32>
    %c0_3 = arith.constant 0 : index
    %c0_4 = arith.constant 0 : index
    %2 = vector.load %arg7[%c0_3, %c0_4] : memref<1x128xf32, #tpu.memory_space<vmem>>, vector<1x128xf32>
    %c0_5 = arith.constant 0 : index
    %c0_6 = arith.constant 0 : index
    %3 = vector.load %arg1[%c0_5, %c0_6] : memref<8x784xbf16, #tpu.memory_space<vmem>>, vector<8x784xbf16>
    %c0_7 = arith.constant 0 : index
    %c0_8 = arith.constant 0 : index
    %4 = vector.load %arg2[%c0_7, %c0_8] : memref<784x128xbf16, #tpu.memory_space<vmem>>, vector<784x128xbf16>
    %cst = arith.constant dense<0.000000e+00> : vector<8x128xf32>
    %5 = tpu.matmul %3, %4, %cst {dimension_numbers = #tpu.dot_dimension_numbers<[1], [0], [0], [1], [0, 0, 1, 1], [], []>} : vector<8x784xbf16>, vector<784x128xbf16>, vector<8x128xf32> -> vector<8x128xf32>
    %6 = vector.broadcast %0 : vector<1x128xf32> to vector<8x128xf32>
    %7 = arith.addf %5, %6 : vector<8x128xf32>
    %cst_9 = arith.constant 0.000000e+00 : f32
    %8 = vector.broadcast %cst_9 : f32 to vector<8x128xf32>
    %9 = arith.maximumf %7, %8 : vector<8x128xf32>
    %10 = arith.truncf %9 : vector<8x128xf32> to vector<8x128xbf16>
    %c0_10 = arith.constant 0 : index
    %c0_11 = arith.constant 0 : index
    %11 = vector.load %arg4[%c0_10, %c0_11] : memref<128x128xbf16, #tpu.memory_space<vmem>>, vector<128x128xbf16>
    %cst_12 = arith.constant dense<0.000000e+00> : vector<8x128xf32>
    %12 = tpu.matmul %10, %11, %cst_12 {dimension_numbers = #tpu.dot_dimension_numbers<[1], [0], [0], [1], [0, 0, 1, 1], [], []>} : vector<8x128xbf16>, vector<128x128xbf16>, vector<8x128xf32> -> vector<8x128xf32>
    %13 = vector.broadcast %1 : vector<1x128xf32> to vector<8x128xf32>
    %14 = arith.addf %12, %13 : vector<8x128xf32>
    %cst_13 = arith.constant 0.000000e+00 : f32
    %15 = vector.broadcast %cst_13 : f32 to vector<8x128xf32>
    %16 = arith.maximumf %14, %15 : vector<8x128xf32>
    %17 = arith.truncf %16 : vector<8x128xf32> to vector<8x128xbf16>
    %c0_14 = arith.constant 0 : index
    %c0_15 = arith.constant 0 : index
    %18 = vector.load %arg6[%c0_14, %c0_15] : memref<128x128xbf16, #tpu.memory_space<vmem>>, vector<128x128xbf16>
    %cst_16 = arith.constant dense<0.000000e+00> : vector<8x128xf32>
    %19 = tpu.matmul %17, %18, %cst_16 {dimension_numbers = #tpu.dot_dimension_numbers<[1], [0], [0], [1], [0, 0, 1, 1], [], []>} : vector<8x128xbf16>, vector<128x128xbf16>, vector<8x128xf32> -> vector<8x128xf32>
    %20 = vector.broadcast %2 : vector<1x128xf32> to vector<8x128xf32>
    %21 = arith.addf %19, %20 : vector<8x128xf32>
    %c0_17 = arith.constant 0 : index
    %c0_18 = arith.constant 0 : index
    %22 = vector.load %arg8[%c0_17, %c0_18] : memref<8x128xf32, #tpu.memory_space<vmem>>, vector<8x128xf32>
    tpu.vector_store %arg8[%c0_17, %c0_18], %21 {strides = array<i32>} : memref<8x128xf32, #tpu.memory_space<vmem>>, vector<8x128xf32>,
    return
  }
  func.func @transform_0(%arg0: i32) -> (i32, i32) {
    %c0_i32 = arith.constant 0 : i32
    %c0_i32_0 = arith.constant 0 : i32
    return %arg0, %c0_i32 : i32, i32
  }
  func.func @transform_1(%arg0: i32) -> (i32, i32) {
    %c0_i32 = arith.constant 0 : i32
    %c0_i32_0 = arith.constant 0 : i32
    %c0_i32_1 = arith.constant 0 : i32
    return %c0_i32, %c0_i32_0 : i32, i32
  }
  func.func @transform_2(%arg0: i32) -> (i32, i32) {
    %c0_i32 = arith.constant 0 : i32
    %c0_i32_0 = arith.constant 0 : i32
    %c0_i32_1 = arith.constant 0 : i32
    return %c0_i32, %c0_i32_0 : i32, i32
  }
  func.func @transform_3(%arg0: i32) -> (i32, i32) {
    %c0_i32 = arith.constant 0 : i32
    %c0_i32_0 = arith.constant 0 : i32
    %c0_i32_1 = arith.constant 0 : i32
    return %c0_i32, %c0_i32_0 : i32, i32
  }
  func.func @transform_4(%arg0: i32) -> (i32, i32) {
    %c0_i32 = arith.constant 0 : i32
    %c0_i32_0 = arith.constant 0 : i32
    %c0_i32_1 = arith.constant 0 : i32
    return %c0_i32, %c0_i32_0 : i32, i32
  }
  func.func @transform_5(%arg0: i32) -> (i32, i32) {
    %c0_i32 = arith.constant 0 : i32
    %c0_i32_0 = arith.constant 0 : i32
    %c0_i32_1 = arith.constant 0 : i32
    return %c0_i32, %c0_i32_0 : i32, i32
  }
  func.func @transform_6(%arg0: i32) -> (i32, i32) {
    %c0_i32 = arith.constant 0 : i32
    %c0_i32_0 = arith.constant 0 : i32
    %c0_i32_1 = arith.constant 0 : i32
    return %c0_i32, %c0_i32_0 : i32, i32
  }
  func.func @transform_7(%arg0: i32) -> (i32, i32) {
    %c0_i32 = arith.constant 0 : i32
    %c0_i32_0 = arith.constant 0 : i32
    return %arg0, %c0_i32 : i32, i32
  }
}

</mosaic_0001>

<llo_original>
// kernel: mlp_forward.1
$region0: #{mlp_forward.1}
  #allocation0 [shape = 'u32[]', space=smem, size = 0x4, offset = 0x4, fixed_abs, tag = 'smem constant byte address 0x4 - core index']
  #allocation1 [shape = 'u32[144,128]{1,0:T(1,128)}', space=vmem, size = 0x12000, scoped, tag = 'internal scratch']
  %s0 = inlined_call_operand.vmem [shape: bf16[8,784], index: 0, kind: input, shape index: {}]
  %s1 = inlined_call_operand.hbm [shape: bf16[784,128], index: 1, kind: input, shape index: {}]
  %s2 = inlined_call_operand.vmem [shape: f32[1,128], index: 2, kind: input, shape index: {}]
  %s3 = inlined_call_operand.vmem [shape: bf16[128,128], index: 3, kind: input, shape index: {}]
  %s4 = inlined_call_operand.vmem [shape: f32[1,128], index: 4, kind: input, shape index: {}]
  %s5 = inlined_call_operand.hbm [shape: bf16[128,128], index: 5, kind: input, shape index: {}]
  %s6 = inlined_call_operand.vmem [shape: f32[1,128], index: 6, kind: input, shape index: {}]
  %s7 = inlined_call_operand.hbm [shape: f32[8,128], index: 7, kind: output, shape index: {}]
  %s8 = sld [smem:[#allocation0]]
  $region46: #{mlp_forward.1} parent=0
    _
  %s10 = ssub.s32 1, %s8
  %s11 = scalar_select 0, %s10, %s8
  $region1: #{mlp_forward.1} parent=0
    #allocation2 [shape = 'u8[200704]{0}', space=vmem, size = 0x31000, scoped, tag = 'input window, operand 1, single buffered']
    #allocation3 [shape = 's32[1]{0}', space=sflag, size = 0x4, scoped, tag = 'scoped memory for mlp_forward.1']
    #allocation4 [shape = 's32[1]{0}', space=sflag, size = 0x4, scoped, tag = 'scoped memory for mlp_forward.1']
    #allocation5 [shape = 'u8[32768]{0}', space=vmem, size = 0x8000, scoped, tag = 'input window, operand 5, single buffered']
    #allocation6 [shape = 's32[1]{0}', space=sflag, size = 0x4, scoped, tag = 'scoped memory for mlp_forward.1']
    #allocation7 [shape = 'u8[4096]{0}', space=vmem, size = 0x1000, scoped, tag = 'output window, operand 0, single buffered']
    %12 = vsyncpa [#allocation3], 0
    %13 = vsyncpa [#allocation6], 0
    %14 = vsyncpa [#allocation4], 0
    // Predicated region
    $region2: #{mlp_forward.1} parent=1 // pred_check
      _
    $region3: #{mlp_forward.1} parent=1 // pred_check_branch
      %16 = sbr.rel (0) target = $region5
    $region4: #{mlp_forward.1} parent=1 // pred_region
      _
    $region5: #{mlp_forward.1} parent=1 // pred_fallthru
      _
    // Predicated region
    $region6: #{mlp_forward.1} parent=1 // pred_check
      _
    $region7: #{mlp_forward.1} parent=1 // pred_check_branch
      %18 = sbr.rel (0) target = $region9
    $region8: #{mlp_forward.1} parent=1 // pred_region
      %s20 = ssub.s32 6272, 6272
      %21 = vsyncadd [#allocation3], %s20
      %s22 = sshll.u32 [#allocation2], 4
      %s23 = int_to_ptr.vmem [resolvable:$true] %s22
      %28 = dma.hbm_to_vmem [thread:$0]  %s1, 6272, %s23, [#allocation3], 64, 64, 4
    $region9: #{mlp_forward.1} parent=1 // pred_fallthru
      _
    // Predicated region
    $region10: #{mlp_forward.1} parent=1 // pred_check
      _
    $region11: #{mlp_forward.1} parent=1 // pred_check_branch
      %30 = sbr.rel (0) target = $region13
    $region12: #{mlp_forward.1} parent=1 // pred_region
      _
    $region13: #{mlp_forward.1} parent=1 // pred_fallthru
      _
    // Predicated region
    $region14: #{mlp_forward.1} parent=1 // pred_check
      _
    $region15: #{mlp_forward.1} parent=1 // pred_check_branch
      %32 = sbr.rel (0) target = $region17
    $region16: #{mlp_forward.1} parent=1 // pred_region
      _
    $region17: #{mlp_forward.1} parent=1 // pred_fallthru
      _
    // Predicated region
    $region18: #{mlp_forward.1} parent=1 // pred_check
      _
    $region19: #{mlp_forward.1} parent=1 // pred_check_branch
      %34 = sbr.rel (0) target = $region21
    $region20: #{mlp_forward.1} parent=1 // pred_region
      _
    $region21: #{mlp_forward.1} parent=1 // pred_fallthru
      _
    // Predicated region
    $region22: #{mlp_forward.1} parent=1 // pred_check
      _
    $region23: #{mlp_forward.1} parent=1 // pred_check_branch
      %36 = sbr.rel (0) target = $region25
    $region24: #{mlp_forward.1} parent=1 // pred_region
      %s38 = ssub.s32 1024, 1024
      %39 = vsyncadd [#allocation6], %s38
      %s40 = sshll.u32 [#allocation5], 4
      %s41 = int_to_ptr.vmem [resolvable:$true] %s40
      %46 = dma.hbm_to_vmem [thread:$0]  %s5, 1024, %s41, [#allocation6], 64, 64, 4
    $region25: #{mlp_forward.1} parent=1 // pred_fallthru
      _
    // Predicated region
    $region26: #{mlp_forward.1} parent=1 // pred_check
      _
    $region27: #{mlp_forward.1} parent=1 // pred_check_branch
      %48 = sbr.rel (0) target = $region29
    $region28: #{mlp_forward.1} parent=1 // pred_region
      _
    $region29: #{mlp_forward.1} parent=1 // pred_fallthru
      _
    // Predicated region
    $region30: #{mlp_forward.1} parent=1 // pred_check
      _
    $region31: #{mlp_forward.1} parent=1 // pred_check_branch
      %50 = sbr.rel (0) target = $region33
    $region32: #{mlp_forward.1} parent=1 // pred_region
      %51 = dma.done [#allocation3], 6272
    $region33: #{mlp_forward.1} parent=1 // pred_fallthru
      _
    // Predicated region
    $region34: #{mlp_forward.1} parent=1 // pred_check
      _
    $region35: #{mlp_forward.1} parent=1 // pred_check_branch
      %53 = sbr.rel (0) target = $region37
    $region36: #{mlp_forward.1} parent=1 // pred_region
      %54 = dma.done [#allocation6], 1024
    $region37: #{mlp_forward.1} parent=1 // pred_fallthru
      _
    %v56 = vld [vmem:[%s2] sm:$0x1]
    %v57 = vld [vmem:[%s4] sm:$0x1]
    %v58 = vld [vmem:[%s6] sm:$0x1]
    %v59 = vld [vmem:[%s0] sm:$0xff]
    %v60 = vld [vmem:[%s0 + $0x8] sm:$0xff]
    %v61 = vld [vmem:[%s0 + $0x10] sm:$0xff]
    %v62 = vld [vmem:[%s0 + $0x18] sm:$0xf]
    %v63 = vld [vmem:[#allocation2] sm:$0xf]
    %v64 = vld [vmem:[#allocation2 + $0x4] sm:$0xf]
    %v65 = vld [vmem:[#allocation2 + $0x8] sm:$0xf]
    %v66 = vld [vmem:[#allocation2 + $0xc] sm:$0xf]
    %v67 = vld [vmem:[#allocation2 + $0x10] sm:$0xf]
    %v68 = vld [vmem:[#allocation2 + $0x14] sm:$0xf]
    %v69 = vld [vmem:[#allocation2 + $0x18] sm:$0xf]
    %v70 = vld [vmem:[#allocation2 + $0x1c] sm:$0xf]
    %v71 = vld [vmem:[#allocation2 + $0x20] sm:$0xf]
    %v72 = vld [vmem:[#allocation2 + $0x24] sm:$0xf]
    %v73 = vld [vmem:[#allocation2 + $0x28] sm:$0xf]
    %v74 = vld [vmem:[#allocation2 + $0x2c] sm:$0xf]
    %v75 = vld [vmem:[#allocation2 + $0x30] sm:$0xf]
    %v76 = vld [vmem:[#allocation2 + $0x34] sm:$0xf]
    %v77 = vld [vmem:[#allocation2 + $0x38] sm:$0xf]
    %v78 = vld [vmem:[#allocation2 + $0x3c] sm:$0xf]
    %v79 = vld [vmem:[#allocation2 + $0x40] sm:$0xf]
    %v80 = vld [vmem:[#allocation2 + $0x44] sm:$0xf]
    %v81 = vld [vmem:[#allocation2 + $0x48] sm:$0xf]
    %v82 = vld [vmem:[#allocation2 + $0x4c] sm:$0xf]
    %v83 = vld [vmem:[#allocation2 + $0x50] sm:$0xf]
    %v84 = vld [vmem:[#allocation2 + $0x54] sm:$0xf]
    %v85 = vld [vmem:[#allocation2 + $0x58] sm:$0xf]
    %v86 = vld [vmem:[#allocation2 + $0x5c] sm:$0xf]
    %v87 = vld [vmem:[#allocation2 + $0x60] sm:$0xf]
    %v88 = vld [vmem:[#allocation2 + $0x64] sm:$0xf]
    %v89 = vld [vmem:[#allocation2 + $0x68] sm:$0xf]
    %v90 = vld [vmem:[#allocation2 + $0x6c] sm:$0xf]
    %v91 = vld [vmem:[#allocation2 + $0x70] sm:$0xf]
    %v92 = vld [vmem:[#allocation2 + $0x74] sm:$0xf]
    %v93 = vld [vmem:[#allocation2 + $0x78] sm:$0xf]
    %v94 = vld [vmem:[#allocation2 + $0x7c] sm:$0xf]
    %v95 = vld [vmem:[#allocation2 + $0x80] sm:$0xf]
    %v96 = vld [vmem:[#allocation2 + $0x84] sm:$0xf]
    %v97 = vld [vmem:[#allocation2 + $0x88] sm:$0xf]
    %v98 = vld [vmem:[#allocation2 + $0x8c] sm:$0xf]
    %v99 = vld [vmem:[#allocation2 + $0x90] sm:$0xf]
    %v100 = vld [vmem:[#allocation2 + $0x94] sm:$0xf]
    %v101 = vld [vmem:[#allocation2 + $0x98] sm:$0xf]
    %v102 = vld [vmem:[#allocation2 + $0x9c] sm:$0xf]
    %v103 = vld [vmem:[#allocation2 + $0xa0] sm:$0xf]
    %v104 = vld [vmem:[#allocation2 + $0xa4] sm:$0xf]
    %v105 = vld [vmem:[#allocation2 + $0xa8] sm:$0xf]
    %v106 = vld [vmem:[#allocation2 + $0xac] sm:$0xf]
    %v107 = vld [vmem:[#allocation2 + $0xb0] sm:$0xf]
    %v108 = vld [vmem:[#allocation2 + $0xb4] sm:$0xf]
    %v109 = vld [vmem:[#allocation2 + $0xb8] sm:$0xf]
    %v110 = vld [vmem:[#allocation2 + $0xbc] sm:$0xf]
    %v111 = vld [vmem:[#allocation2 + $0xc0] sm:$0xf]
    %v112 = vld [vmem:[#allocation2 + $0xc4] sm:$0xf]
    %v113 = vld [vmem:[#allocation2 + $0xc8] sm:$0xf]
    %v114 = vld [vmem:[#allocation2 + $0xcc] sm:$0xf]
    %v115 = vld [vmem:[#allocation2 + $0xd0] sm:$0xf]
    %v116 = vld [vmem:[#allocation2 + $0xd4] sm:$0xf]
    %v117 = vld [vmem:[#allocation2 + $0xd8] sm:$0xf]
    %v118 = vld [vmem:[#allocation2 + $0xdc] sm:$0xf]
    %v119 = vld [vmem:[#allocation2 + $0xe0] sm:$0xf]
    %v120 = vld [vmem:[#allocation2 + $0xe4] sm:$0xf]
    %v121 = vld [vmem:[#allocation2 + $0xe8] sm:$0xf]
    %v122 = vld [vmem:[#allocation2 + $0xec] sm:$0xf]
    %v123 = vld [vmem:[#allocation2 + $0xf0] sm:$0xf]
    %v124 = vld [vmem:[#allocation2 + $0xf4] sm:$0xf]
    %v125 = vld [vmem:[#allocation2 + $0xf8] sm:$0xf]
    %v126 = vld [vmem:[#allocation2 + $0xfc] sm:$0xf]
    %v127 = vld [vmem:[#allocation2 + $0x100] sm:$0xf]
    %v128 = vld [vmem:[#allocation2 + $0x104] sm:$0xf]
    %v129 = vld [vmem:[#allocation2 + $0x108] sm:$0xf]
    %v130 = vld [vmem:[#allocation2 + $0x10c] sm:$0xf]
    %v131 = vld [vmem:[#allocation2 + $0x110] sm:$0xf]
    %v132 = vld [vmem:[#allocation2 + $0x114] sm:$0xf]
    %v133 = vld [vmem:[#allocation2 + $0x118] sm:$0xf]
    %v134 = vld [vmem:[#allocation2 + $0x11c] sm:$0xf]
    %v135 = vld [vmem:[#allocation2 + $0x120] sm:$0xf]
    %v136 = vld [vmem:[#allocation2 + $0x124] sm:$0xf]
    %v137 = vld [vmem:[#allocation2 + $0x128] sm:$0xf]
    %v138 = vld [vmem:[#allocation2 + $0x12c] sm:$0xf]
    %v139 = vld [vmem:[#allocation2 + $0x130] sm:$0xf]
    %v140 = vld [vmem:[#allocation2 + $0x134] sm:$0xf]
    %v141 = vld [vmem:[#allocation2 + $0x138] sm:$0xf]
    %v142 = vld [vmem:[#allocation2 + $0x13c] sm:$0xf]
    %v143 = vld [vmem:[#allocation2 + $0x140] sm:$0xf]
    %v144 = vld [vmem:[#allocation2 + $0x144] sm:$0xf]
    %v145 = vld [vmem:[#allocation2 + $0x148] sm:$0xf]
    %v146 = vld [vmem:[#allocation2 + $0x14c] sm:$0xf]
    %v147 = vld [vmem:[#allocation2 + $0x150] sm:$0xf]
    %v148 = vld [vmem:[#allocation2 + $0x154] sm:$0xf]
    %v149 = vld [vmem:[#allocation2 + $0x158] sm:$0xf]
    %v150 = vld [vmem:[#allocation2 + $0x15c] sm:$0xf]
    %v151 = vld [vmem:[#allocation2 + $0x160] sm:$0xf]
    %v152 = vld [vmem:[#allocation2 + $0x164] sm:$0xf]
    %v153 = vld [vmem:[#allocation2 + $0x168] sm:$0xf]
    %v154 = vld [vmem:[#allocation2 + $0x16c] sm:$0xf]
    %v155 = vld [vmem:[#allocation2 + $0x170] sm:$0xf]
    %v156 = vld [vmem:[#allocation2 + $0x174] sm:$0xf]
    %v157 = vld [vmem:[#allocation2 + $0x178] sm:$0xf]
    %v158 = vld [vmem:[#allocation2 + $0x17c] sm:$0xf]
    %v159 = vld [vmem:[#allocation2 + $0x180] sm:$0xf]
    %v160 = vld [vmem:[#allocation2 + $0x184] sm:$0xf]
    %v162 = vlaneseq
    %v163 = vshrl.u32 %v162, 7
    %v164 = vsub.s32 0, %v163
    %v165 = vrot.slane %v56, %v164
    %v171 = vunpack.c.l.b16 %v59
    %v172 = vunpack.c.h.b16 %v59
    %v173 = vunpack.c.l.b16 %v60
    %v174 = vunpack.c.h.b16 %v60
    %v175 = vunpack.c.l.b16 %v61
    %v176 = vunpack.c.h.b16 %v61
    %v177 = vunpack.c.l.b16 %v62
    %v178 = vpack.c.b16 %v171, %v171
    %v179 = vpack.c.b16 %v172, %v172
    %v180 = vpack.c.b16 %v173, %v173
    %v181 = vpack.c.b16 %v174, %v174
    %v182 = vpack.c.b16 %v175, %v175
    %v183 = vpack.c.b16 %v176, %v176
    %v184 = vpack.c.b16 %v177, %v177
    %v289 = vunpack.c.l.b16 %v63
    %v290 = vunpack.c.l.b16 %v64
    %v291 = vunpack.c.l.b16 %v65
    %v292 = vunpack.c.l.b16 %v66
    %v293 = vunpack.c.l.b16 %v67
    %v294 = vunpack.c.l.b16 %v68
    %v295 = vunpack.c.l.b16 %v69
    %v296 = vunpack.c.l.b16 %v70
    %v297 = vunpack.c.l.b16 %v71
    %v298 = vunpack.c.l.b16 %v72
    %v299 = vunpack.c.l.b16 %v73
    %v300 = vunpack.c.l.b16 %v74
    %v301 = vunpack.c.l.b16 %v75
    %v302 = vunpack.c.l.b16 %v76
    %v303 = vunpack.c.l.b16 %v77
    %v304 = vunpack.c.l.b16 %v78
    %v305 = vunpack.c.l.b16 %v79
    %v306 = vunpack.c.l.b16 %v80
    %v307 = vunpack.c.l.b16 %v81
    %v308 = vunpack.c.l.b16 %v82
    %v309 = vunpack.c.l.b16 %v83
    %v310 = vunpack.c.l.b16 %v84
    %v311 = vunpack.c.l.b16 %v85
    %v312 = vunpack.c.l.b16 %v86
    %v313 = vunpack.c.l.b16 %v87
    %v314 = vunpack.c.l.b16 %v88
    %v315 = vunpack.c.l.b16 %v89
    %v316 = vunpack.c.l.b16 %v90
    %v317 = vunpack.c.l.b16 %v91
    %v318 = vunpack.c.l.b16 %v92
    %v319 = vunpack.c.l.b16 %v93
    %v320 = vunpack.c.l.b16 %v94
    %v321 = vunpack.c.l.b16 %v95
    %v322 = vunpack.c.l.b16 %v96
    %v323 = vunpack.c.l.b16 %v97
    %v324 = vunpack.c.l.b16 %v98
    %v325 = vunpack.c.l.b16 %v99
    %v326 = vunpack.c.l.b16 %v100
    %v327 = vunpack.c.l.b16 %v101
    %v328 = vunpack.c.l.b16 %v102
    %v329 = vunpack.c.l.b16 %v103
    %v330 = vunpack.c.l.b16 %v104
    %v331 = vunpack.c.l.b16 %v105
    %v332 = vunpack.c.l.b16 %v106
    %v333 = vunpack.c.l.b16 %v107
    %v334 = vunpack.c.l.b16 %v108
    %v335 = vunpack.c.l.b16 %v109
    %v336 = vunpack.c.l.b16 %v110
    %v337 = vunpack.c.l.b16 %v111
    %v338 = vunpack.c.l.b16 %v112
    %v339 = vunpack.c.l.b16 %v113
    %v340 = vunpack.c.l.b16 %v114
    %v341 = vunpack.c.l.b16 %v115
    %v342 = vunpack.c.l.b16 %v116
    %v343 = vunpack.c.l.b16 %v117
    %v344 = vunpack.c.l.b16 %v118
    %v345 = vunpack.c.l.b16 %v119
    %v346 = vunpack.c.l.b16 %v120
    %v347 = vunpack.c.l.b16 %v121
    %v348 = vunpack.c.l.b16 %v122
    %v349 = vunpack.c.l.b16 %v123
    %v350 = vunpack.c.l.b16 %v124
    %v351 = vunpack.c.l.b16 %v125
    %v352 = vunpack.c.l.b16 %v126
    %v353 = vunpack.c.l.b16 %v127
    %v354 = vunpack.c.l.b16 %v128
    %v355 = vunpack.c.l.b16 %v129
    %v356 = vunpack.c.l.b16 %v130
    %v357 = vunpack.c.l.b16 %v131
    %v358 = vunpack.c.l.b16 %v132
    %v359 = vunpack.c.l.b16 %v133
    %v360 = vunpack.c.l.b16 %v134
    %v361 = vunpack.c.l.b16 %v135
    %v362 = vunpack.c.l.b16 %v136
    %v363 = vunpack.c.l.b16 %v137
    %v364 = vunpack.c.l.b16 %v138
    %v365 = vunpack.c.l.b16 %v139
    %v366 = vunpack.c.l.b16 %v140
    %v367 = vunpack.c.l.b16 %v141
    %v368 = vunpack.c.l.b16 %v142
    %v369 = vunpack.c.l.b16 %v143
    %v370 = vunpack.c.l.b16 %v144
    %v371 = vunpack.c.l.b16 %v145
    %v372 = vunpack.c.l.b16 %v146
    %v373 = vunpack.c.l.b16 %v147
    %v374 = vunpack.c.l.b16 %v148
    %v375 = vunpack.c.l.b16 %v149
    %v376 = vunpack.c.l.b16 %v150
    %v377 = vunpack.c.l.b16 %v151
    %v378 = vunpack.c.l.b16 %v152
    %v379 = vunpack.c.l.b16 %v153
    %v380 = vunpack.c.l.b16 %v154
    %v381 = vunpack.c.l.b16 %v155
    %v382 = vunpack.c.l.b16 %v156
    %v383 = vunpack.c.l.b16 %v157
    %v384 = vunpack.c.l.b16 %v158
    %v385 = vunpack.c.l.b16 %v159
    %v386 = vunpack.c.l.b16 %v160
    %v387 = vpack.c.b16 %v290, %v289
    %v388 = vpack.c.b16 %v292, %v291
    %v389 = vpack.c.b16 %v294, %v293
    %v390 = vpack.c.b16 %v296, %v295
    %v391 = vpack.c.b16 %v298, %v297
    %v392 = vpack.c.b16 %v300, %v299
    %v393 = vpack.c.b16 %v302, %v301
    %v394 = vpack.c.b16 %v304, %v303
    %v395 = vpack.c.b16 %v306, %v305
    %v396 = vpack.c.b16 %v308, %v307
    %v397 = vpack.c.b16 %v310, %v309
    %v398 = vpack.c.b16 %v312, %v311
    %v399 = vpack.c.b16 %v314, %v313
    %v400 = vpack.c.b16 %v316, %v315
    %v401 = vpack.c.b16 %v318, %v317
    %v402 = vpack.c.b16 %v320, %v319
    %v403 = vpack.c.b16 %v322, %v321
    %v404 = vpack.c.b16 %v324, %v323
    %v405 = vpack.c.b16 %v326, %v325
    %v406 = vpack.c.b16 %v328, %v327
    %v407 = vpack.c.b16 %v330, %v329
    %v408 = vpack.c.b16 %v332, %v331
    %v409 = vpack.c.b16 %v334, %v333
    %v410 = vpack.c.b16 %v336, %v335
    %v411 = vpack.c.b16 %v338, %v337
    %v412 = vpack.c.b16 %v340, %v339
    %v413 = vpack.c.b16 %v342, %v341
    %v414 = vpack.c.b16 %v344, %v343
    %v415 = vpack.c.b16 %v346, %v345
    %v416 = vpack.c.b16 %v348, %v347
    %v417 = vpack.c.b16 %v350, %v349
    %v418 = vpack.c.b16 %v352, %v351
    %v419 = vpack.c.b16 %v354, %v353
    %v420 = vpack.c.b16 %v356, %v355
    %v421 = vpack.c.b16 %v358, %v357
    %v422 = vpack.c.b16 %v360, %v359
    %v423 = vpack.c.b16 %v362, %v361
    %v424 = vpack.c.b16 %v364, %v363
    %v425 = vpack.c.b16 %v366, %v365
    %v426 = vpack.c.b16 %v368, %v367
    %v427 = vpack.c.b16 %v370, %v369
    %v428 = vpack.c.b16 %v372, %v371
    %v429 = vpack.c.b16 %v374, %v373
    %v430 = vpack.c.b16 %v376, %v375
    %v431 = vpack.c.b16 %v378, %v377
    %v432 = vpack.c.b16 %v380, %v379
    %v433 = vpack.c.b16 %v382, %v381
    %v434 = vpack.c.b16 %v384, %v383
    %v435 = vpack.c.b16 %v386, %v385
    %vm485 = vcmask 130048
    %v487 = vsel %vm485, %v184, 0
    %489 = vmatprep.subr.bf16.mxu0 0
    %490 = vmatpush1.bf16.msra.mxu0 %v387
    %491 = vmatprep.subr.bf16.mxu0 0
    %492 = vmatpush1.bf16.msra.mxu0 %v388
    %493 = vmatprep.subr.bf16.mxu0 0
    %494 = vmatpush1.bf16.msra.mxu0 %v389
    %495 = vmatprep.subr.bf16.mxu0 0
    %496 = vmatpush1.bf16.msra.mxu0 %v390
    %497 = vmatprep.subr.bf16.mxu0 0
    %498 = vmatpush1.bf16.msra.mxu0 %v391
    %499 = vmatprep.subr.bf16.mxu0 0
    %500 = vmatpush1.bf16.msra.mxu0 %v392
    %501 = vmatprep.subr.bf16.mxu0 0
    %502 = vmatpush1.bf16.msra.mxu0 %v393
    %503 = vmatprep.subr.bf16.mxu0 0
    %504 = vmatpush1.bf16.msra.mxu0 %v394
    %505 = vmatprep.subr.bf16.mxu0 0
    %506 = vmatpush1.bf16.msra.mxu0 %v395
    %507 = vmatprep.subr.bf16.mxu0 0
    %508 = vmatpush1.bf16.msra.mxu0 %v396
    %509 = vmatprep.subr.bf16.mxu0 0
    %510 = vmatpush1.bf16.msra.mxu0 %v397
    %511 = vmatprep.subr.bf16.mxu0 0
    %512 = vmatpush1.bf16.msra.mxu0 %v398
    %513 = vmatprep.subr.bf16.mxu0 0
    %514 = vmatpush1.bf16.msra.mxu0 %v399
    %515 = vmatprep.subr.bf16.mxu0 0
    %516 = vmatpush1.bf16.msra.mxu0 %v400
    %517 = vmatprep.subr.bf16.mxu0 0
    %518 = vmatpush1.bf16.msra.mxu0 %v401
    %519 = vmatprep.subr.bf16.mxu0 0
    %520 = vmatpush1.bf16.msra.mxu0 %v402
    %521 = vmatprep.mubr.bf16.mxu0 %v179
    %522 = vmatmul.mubr.bf16.gmra.mrb[0].mxu0 %v178
    %v523 = vpop.f32.mrb[0].mxu0
    %v524 = vadd.f32 %v165, %v523
    %v525 = vpop.f32.mrb[0].mxu0
    %v526 = vpop.f32.mrb[0].mxu0
    %v527 = vpop.f32.mrb[0].mxu0
    %528 = vdwg.mxu0
    %529 = vmatprep.subr.bf16.mxu0 0
    %530 = vmatpush1.bf16.msra.mxu0 %v403
    %531 = vmatprep.subr.bf16.mxu0 0
    %532 = vmatpush1.bf16.msra.mxu0 %v404
    %533 = vmatprep.subr.bf16.mxu0 0
    %534 = vmatpush1.bf16.msra.mxu0 %v405
    %535 = vmatprep.subr.bf16.mxu0 0
    %536 = vmatpush1.bf16.msra.mxu0 %v406
    %537 = vmatprep.subr.bf16.mxu0 0
    %538 = vmatpush1.bf16.msra.mxu0 %v407
    %539 = vmatprep.subr.bf16.mxu0 0
    %540 = vmatpush1.bf16.msra.mxu0 %v408
    %541 = vmatprep.subr.bf16.mxu0 0
    %542 = vmatpush1.bf16.msra.mxu0 %v409
    %543 = vmatprep.subr.bf16.mxu0 0
    %544 = vmatpush1.bf16.msra.mxu0 %v410
    %545 = vmatprep.subr.bf16.mxu0 0
    %546 = vmatpush1.bf16.msra.mxu0 %v411
    %547 = vmatprep.subr.bf16.mxu0 0
    %548 = vmatpush1.bf16.msra.mxu0 %v412
    %549 = vmatprep.subr.bf16.mxu0 0
    %550 = vmatpush1.bf16.msra.mxu0 %v413
    %551 = vmatprep.subr.bf16.mxu0 0
    %552 = vmatpush1.bf16.msra.mxu0 %v414
    %553 = vmatprep.subr.bf16.mxu0 0
    %554 = vmatpush1.bf16.msra.mxu0 %v415
    %555 = vmatprep.subr.bf16.mxu0 0
    %556 = vmatpush1.bf16.msra.mxu0 %v416
    %557 = vmatprep.subr.bf16.mxu0 0
    %558 = vmatpush1.bf16.msra.mxu0 %v417
    %559 = vmatprep.subr.bf16.mxu0 0
    %560 = vmatpush1.bf16.msra.mxu0 %v418
    %561 = vmatprep.mubr.bf16.mxu0 %v181
    %562 = vmatmul.mubr.bf16.gmra.mrb[0].mxu0 %v180
    %v563 = vpop.f32.mrb[0].mxu0
    %v564 = vadd.f32 %v524, %v563
    %v565 = vpop.f32.mrb[0].mxu0
    %v566 = vpop.f32.mrb[0].mxu0
    %v567 = vpop.f32.mrb[0].mxu0
    %568 = vdwg.mxu0
    %569 = vmatprep.subr.bf16.mxu0 0
    %570 = vmatpush1.bf16.msra.mxu0 %v419
    %571 = vmatprep.subr.bf16.mxu0 0
    %572 = vmatpush1.bf16.msra.mxu0 %v420
    %573 = vmatprep.subr.bf16.mxu0 0
    %574 = vmatpush1.bf16.msra.mxu0 %v421
    %575 = vmatprep.subr.bf16.mxu0 0
    %576 = vmatpush1.bf16.msra.mxu0 %v422
    %577 = vmatprep.subr.bf16.mxu0 0
    %578 = vmatpush1.bf16.msra.mxu0 %v423
    %579 = vmatprep.subr.bf16.mxu0 0
    %580 = vmatpush1.bf16.msra.mxu0 %v424
    %581 = vmatprep.subr.bf16.mxu0 0
    %582 = vmatpush1.bf16.msra.mxu0 %v425
    %583 = vmatprep.subr.bf16.mxu0 0
    %584 = vmatpush1.bf16.msra.mxu0 %v426
    %585 = vmatprep.subr.bf16.mxu0 0
    %586 = vmatpush1.bf16.msra.mxu0 %v427
    %587 = vmatprep.subr.bf16.mxu0 0
    %588 = vmatpush1.bf16.msra.mxu0 %v428
    %589 = vmatprep.subr.bf16.mxu0 0
    %590 = vmatpush1.bf16.msra.mxu0 %v429
    %591 = vmatprep.subr.bf16.mxu0 0
    %592 = vmatpush1.bf16.msra.mxu0 %v430
    %593 = vmatprep.subr.bf16.mxu0 0
    %594 = vmatpush1.bf16.msra.mxu0 %v431
    %595 = vmatprep.subr.bf16.mxu0 0
    %596 = vmatpush1.bf16.msra.mxu0 %v432
    %597 = vmatprep.subr.bf16.mxu0 0
    %598 = vmatpush1.bf16.msra.mxu0 %v433
    %599 = vmatprep.subr.bf16.mxu0 0
    %600 = vmatpush1.bf16.msra.mxu0 %v434
    %601 = vmatprep.mubr.bf16.mxu0 %v183
    %602 = vmatmul.mubr.bf16.gmra.mrb[0].mxu0 %v182
    %v603 = vpop.f32.mrb[0].mxu0
    %v604 = vadd.f32 %v564, %v603
    %v605 = vpop.f32.mrb[0].mxu0
    %v606 = vpop.f32.mrb[0].mxu0
    %v607 = vpop.f32.mrb[0].mxu0
    %608 = vdwg.mxu0
    %609 = vmatprep.subr.bf16.mxu0 0
    %610 = vmatpush1.bf16.msra.mxu0 %v435
    %611 = vmatprep.subr.bf16.mxu0 0
    %612 = vmatpush1.bf16.msra.mxu0 0
    %613 = vmatprep.subr.bf16.mxu0 0
    %614 = vmatpush1.bf16.msra.mxu0 0
    %615 = vmatprep.subr.bf16.mxu0 0
    %616 = vmatpush1.bf16.msra.mxu0 0
    %617 = vmatprep.subr.bf16.mxu0 0
    %618 = vmatpush1.bf16.msra.mxu0 0
    %619 = vmatprep.subr.bf16.mxu0 0
    %620 = vmatpush1.bf16.msra.mxu0 0
    %621 = vmatprep.subr.bf16.mxu0 0
    %622 = vmatpush1.bf16.msra.mxu0 0
    %623 = vmatprep.subr.bf16.mxu0 0
    %624 = vmatpush1.bf16.msra.mxu0 0
    %625 = vmatprep.subr.bf16.mxu0 0
    %626 = vmatpush1.bf16.msra.mxu0 0
    %627 = vmatprep.subr.bf16.mxu0 0
    %628 = vmatpush1.bf16.msra.mxu0 0
    %629 = vmatprep.subr.bf16.mxu0 0
    %630 = vmatpush1.bf16.msra.mxu0 0
    %631 = vmatprep.subr.bf16.mxu0 0
    %632 = vmatpush1.bf16.msra.mxu0 0
    %633 = vmatprep.subr.bf16.mxu0 0
    %634 = vmatpush1.bf16.msra.mxu0 0
    %635 = vmatprep.subr.bf16.mxu0 0
    %636 = vmatpush1.bf16.msra.mxu0 0
    %637 = vmatprep.subr.bf16.mxu0 0
    %638 = vmatpush1.bf16.msra.mxu0 0
    %639 = vmatprep.subr.bf16.mxu0 0
    %640 = vmatpush1.bf16.msra.mxu0 0
    %641 = vmatprep.mubr.bf16.mxu0 0
    %642 = vmatmul.mubr.bf16.gmra.mrb[0].mxu0 %v487
    %v643 = vpop.f32.mrb[0].mxu0
    %v644 = vadd.f32 %v604, %v643
    %v645 = vpop.f32.mrb[0].mxu0
    %v646 = vpop.f32.mrb[0].mxu0
    %v647 = vpop.f32.mrb[0].mxu0
    %648 = vdwg.mxu0
    %v649 = vmax.f32 %v644, 0.0
    %v650 = vpack.c.bf16 %v649, %v649
    %v651 = vld [vmem:[%s3] sm:$0xf]
    %v652 = vld [vmem:[%s3 + $0x4] sm:$0xf]
    %v653 = vld [vmem:[%s3 + $0x8] sm:$0xf]
    %v654 = vld [vmem:[%s3 + $0xc] sm:$0xf]
    %v655 = vld [vmem:[%s3 + $0x10] sm:$0xf]
    %v656 = vld [vmem:[%s3 + $0x14] sm:$0xf]
    %v657 = vld [vmem:[%s3 + $0x18] sm:$0xf]
    %v658 = vld [vmem:[%s3 + $0x1c] sm:$0xf]
    %v659 = vld [vmem:[%s3 + $0x20] sm:$0xf]
    %v660 = vld [vmem:[%s3 + $0x24] sm:$0xf]
    %v661 = vld [vmem:[%s3 + $0x28] sm:$0xf]
    %v662 = vld [vmem:[%s3 + $0x2c] sm:$0xf]
    %v663 = vld [vmem:[%s3 + $0x30] sm:$0xf]
    %v664 = vld [vmem:[%s3 + $0x34] sm:$0xf]
    %v665 = vld [vmem:[%s3 + $0x38] sm:$0xf]
    %v666 = vld [vmem:[%s3 + $0x3c] sm:$0xf]
    %v668 = vlaneseq
    %v669 = vshrl.u32 %v668, 7
    %v670 = vsub.s32 0, %v669
    %v671 = vrot.slane %v57, %v670
    %v689 = vunpack.c.l.b16 %v651
    %v690 = vunpack.c.l.b16 %v652
    %v691 = vunpack.c.l.b16 %v653
    %v692 = vunpack.c.l.b16 %v654
    %v693 = vunpack.c.l.b16 %v655
    %v694 = vunpack.c.l.b16 %v656
    %v695 = vunpack.c.l.b16 %v657
    %v696 = vunpack.c.l.b16 %v658
    %v697 = vunpack.c.l.b16 %v659
    %v698 = vunpack.c.l.b16 %v660
    %v699 = vunpack.c.l.b16 %v661
    %v700 = vunpack.c.l.b16 %v662
    %v701 = vunpack.c.l.b16 %v663
    %v702 = vunpack.c.l.b16 %v664
    %v703 = vunpack.c.l.b16 %v665
    %v704 = vunpack.c.l.b16 %v666
    %v705 = vpack.c.b16 %v690, %v689
    %v706 = vpack.c.b16 %v692, %v691
    %v707 = vpack.c.b16 %v694, %v693
    %v708 = vpack.c.b16 %v696, %v695
    %v709 = vpack.c.b16 %v698, %v697
    %v710 = vpack.c.b16 %v700, %v699
    %v711 = vpack.c.b16 %v702, %v701
    %v712 = vpack.c.b16 %v704, %v703
    %721 = vmatprep.subr.bf16.mxu0 0
    %722 = vmatpush1.bf16.msra.mxu0 %v705
    %723 = vmatprep.subr.bf16.mxu0 0
    %724 = vmatpush1.bf16.msra.mxu0 %v706
    %725 = vmatprep.subr.bf16.mxu0 0
    %726 = vmatpush1.bf16.msra.mxu0 %v707
    %727 = vmatprep.subr.bf16.mxu0 0
    %728 = vmatpush1.bf16.msra.mxu0 %v708
    %729 = vmatprep.subr.bf16.mxu0 0
    %730 = vmatpush1.bf16.msra.mxu0 %v709
    %731 = vmatprep.subr.bf16.mxu0 0
    %732 = vmatpush1.bf16.msra.mxu0 %v710
    %733 = vmatprep.subr.bf16.mxu0 0
    %734 = vmatpush1.bf16.msra.mxu0 %v711
    %735 = vmatprep.subr.bf16.mxu0 0
    %736 = vmatpush1.bf16.msra.mxu0 %v712
    %737 = vmatprep.subr.bf16.mxu0 0
    %738 = vmatpush1.bf16.msra.mxu0 0
    %739 = vmatprep.subr.bf16.mxu0 0
    %740 = vmatpush1.bf16.msra.mxu0 0
    %741 = vmatprep.subr.bf16.mxu0 0
    %742 = vmatpush1.bf16.msra.mxu0 0
    %743 = vmatprep.subr.bf16.mxu0 0
    %744 = vmatpush1.bf16.msra.mxu0 0
    %745 = vmatprep.subr.bf16.mxu0 0
    %746 = vmatpush1.bf16.msra.mxu0 0
    %747 = vmatprep.subr.bf16.mxu0 0
    %748 = vmatpush1.bf16.msra.mxu0 0
    %749 = vmatprep.subr.bf16.mxu0 0
    %750 = vmatpush1.bf16.msra.mxu0 0
    %751 = vmatprep.subr.bf16.mxu0 0
    %752 = vmatpush1.bf16.msra.mxu0 0
    %753 = vmatprep.mubr.bf16.mxu0 0
    %754 = vmatmul.mubr.bf16.gmra.mrb[0].mxu0 %v650
    %v755 = vpop.f32.mrb[0].mxu0
    %v756 = vadd.f32 %v671, %v755
    %v757 = vpop.f32.mrb[0].mxu0
    %v758 = vpop.f32.mrb[0].mxu0
    %v759 = vpop.f32.mrb[0].mxu0
    %760 = vdwg.mxu0
    %v761 = vmax.f32 %v756, 0.0
    %v762 = vpack.c.bf16 %v761, %v761
    %v763 = vld [vmem:[#allocation5] sm:$0xf]
    %v764 = vld [vmem:[#allocation5 + $0x4] sm:$0xf]
    %v765 = vld [vmem:[#allocation5 + $0x8] sm:$0xf]
    %v766 = vld [vmem:[#allocation5 + $0xc] sm:$0xf]
    %v767 = vld [vmem:[#allocation5 + $0x10] sm:$0xf]
    %v768 = vld [vmem:[#allocation5 + $0x14] sm:$0xf]
    %v769 = vld [vmem:[#allocation5 + $0x18] sm:$0xf]
    %v770 = vld [vmem:[#allocation5 + $0x1c] sm:$0xf]
    %v771 = vld [vmem:[#allocation5 + $0x20] sm:$0xf]
    %v772 = vld [vmem:[#allocation5 + $0x24] sm:$0xf]
    %v773 = vld [vmem:[#allocation5 + $0x28] sm:$0xf]
    %v774 = vld [vmem:[#allocation5 + $0x2c] sm:$0xf]
    %v775 = vld [vmem:[#allocation5 + $0x30] sm:$0xf]
    %v776 = vld [vmem:[#allocation5 + $0x34] sm:$0xf]
    %v777 = vld [vmem:[#allocation5 + $0x38] sm:$0xf]
    %v778 = vld [vmem:[#allocation5 + $0x3c] sm:$0xf]
    %v780 = vlaneseq
    %v781 = vshrl.u32 %v780, 7
    %v782 = vsub.s32 0, %v781
    %v783 = vrot.slane %v58, %v782
    %v801 = vunpack.c.l.b16 %v763
    %v802 = vunpack.c.l.b16 %v764
    %v803 = vunpack.c.l.b16 %v765
    %v804 = vunpack.c.l.b16 %v766
    %v805 = vunpack.c.l.b16 %v767
    %v806 = vunpack.c.l.b16 %v768
    %v807 = vunpack.c.l.b16 %v769
    %v808 = vunpack.c.l.b16 %v770
    %v809 = vunpack.c.l.b16 %v771
    %v810 = vunpack.c.l.b16 %v772
    %v811 = vunpack.c.l.b16 %v773
    %v812 = vunpack.c.l.b16 %v774
    %v813 = vunpack.c.l.b16 %v775
    %v814 = vunpack.c.l.b16 %v776
    %v815 = vunpack.c.l.b16 %v777
    %v816 = vunpack.c.l.b16 %v778
    %v817 = vpack.c.b16 %v802, %v801
    %v818 = vpack.c.b16 %v804, %v803
    %v819 = vpack.c.b16 %v806, %v805
    %v820 = vpack.c.b16 %v808, %v807
    %v821 = vpack.c.b16 %v810, %v809
    %v822 = vpack.c.b16 %v812, %v811
    %v823 = vpack.c.b16 %v814, %v813
    %v824 = vpack.c.b16 %v816, %v815
    %833 = vmatprep.subr.bf16.mxu0 0
    %834 = vmatpush1.bf16.msra.mxu0 %v817
    %835 = vmatprep.subr.bf16.mxu0 0
    %836 = vmatpush1.bf16.msra.mxu0 %v818
    %837 = vmatprep.subr.bf16.mxu0 0
    %838 = vmatpush1.bf16.msra.mxu0 %v819
    %839 = vmatprep.subr.bf16.mxu0 0
    %840 = vmatpush1.bf16.msra.mxu0 %v820
    %841 = vmatprep.subr.bf16.mxu0 0
    %842 = vmatpush1.bf16.msra.mxu0 %v821
    %843 = vmatprep.subr.bf16.mxu0 0
    %844 = vmatpush1.bf16.msra.mxu0 %v822
    %845 = vmatprep.subr.bf16.mxu0 0
    %846 = vmatpush1.bf16.msra.mxu0 %v823
    %847 = vmatprep.subr.bf16.mxu0 0
    %848 = vmatpush1.bf16.msra.mxu0 %v824
    %849 = vmatprep.subr.bf16.mxu0 0
    %850 = vmatpush1.bf16.msra.mxu0 0
    %851 = vmatprep.subr.bf16.mxu0 0
    %852 = vmatpush1.bf16.msra.mxu0 0
    %853 = vmatprep.subr.bf16.mxu0 0
    %854 = vmatpush1.bf16.msra.mxu0 0
    %855 = vmatprep.subr.bf16.mxu0 0
    %856 = vmatpush1.bf16.msra.mxu0 0
    %857 = vmatprep.subr.bf16.mxu0 0
    %858 = vmatpush1.bf16.msra.mxu0 0
    %859 = vmatprep.subr.bf16.mxu0 0
    %860 = vmatpush1.bf16.msra.mxu0 0
    %861 = vmatprep.subr.bf16.mxu0 0
    %862 = vmatpush1.bf16.msra.mxu0 0
    %863 = vmatprep.subr.bf16.mxu0 0
    %864 = vmatpush1.bf16.msra.mxu0 0
    %865 = vmatprep.mubr.bf16.mxu0 0
    %866 = vmatmul.mubr.bf16.gmra.mrb[0].mxu0 %v762
    %v867 = vpop.f32.mrb[0].mxu0
    %v868 = vadd.f32 %v783, %v867
    %v869 = vpop.f32.mrb[0].mxu0
    %v870 = vpop.f32.mrb[0].mxu0
    %v871 = vpop.f32.mrb[0].mxu0
    %872 = vdwg.mxu0
    %873 = vst [vmem:[#allocation7] sm:$0xff] %v868
    // Predicated region
    $region38: #{mlp_forward.1} parent=1 // pred_check
      _
    $region39: #{mlp_forward.1} parent=1 // pred_check_branch
      %875 = sbr.rel (0) target = $region41
    $region40: #{mlp_forward.1} parent=1 // pred_region
      %s877 = ssub.s32 128, 128
      %878 = vsyncadd [#allocation4], %s877
      %s880 = sshll.u32 [#allocation7], 4
      %s881 = int_to_ptr.vmem [resolvable:$true] %s880
      %883 = dma.vmem_to_hbm [thread:$0]  %s881, 128, %s7, [#allocation4]
    $region41: #{mlp_forward.1} parent=1 // pred_fallthru
      _
    // Predicated region
    $region42: #{mlp_forward.1} parent=1 // pred_check
      _
    $region43: #{mlp_forward.1} parent=1 // pred_check_branch
      %885 = sbr.rel (0) target = $region45
    $region44: #{mlp_forward.1} parent=1 // pred_region
      %886 = dma.done [#allocation4], 128
    $region45: #{mlp_forward.1} parent=1 // pred_fallthru
      _
    %887 = vsyncpa [#allocation3], 1
    %888 = vsyncpa [#allocation6], 1
    %889 = vsyncpa [#allocation4], 1

</llo_original>
